<compile_context>
chip_gen: v7x
topology: tpu7x:2x2x1
jax: 0.10.0
libtpu: 0.0.40
codegen_flags: <defaults>
</compile_context>

<pallas_src>
import jax
import jax.numpy as jnp
from jax.experimental import pallas as pl
from jax.experimental.pallas import tpu as pltpu


# Conservative total-VMEM budget for tile selection: 2x double-buffered output
# block + 1 feats row.  Leaves ample headroom under v7x's 64 MiB physical VMEM
# (v5e/v6e have 128 MiB).
_VMEM_BUDGET_BYTES = 32 * 1024 * 1024
_VMEM_LIMIT_BYTES = 64 * 1024 * 1024  # raise scoped limit above the default


def _pick_batch_tile(n: int, row_bytes: int) -> int:
    """Largest batch tile whose double-buffered output block fits the budget."""
    usable = max(_VMEM_BUDGET_BYTES - row_bytes, row_bytes)
    max_rows = max(1, usable // (2 * row_bytes))
    if max_rows >= n:
        # Full batch in one grid step; block dim == full array dim is always
        # a legal block shape.
        return n
    # Multiple of 8 for f32 sublane packing (also legal for bf16, just not
    # maximally packed).
    return max(8, (max_rows // 8) * 8)


def _broadcast_kernel(feats_ref, out_ref):
    # feats_ref : (1, F)       — same (only) feats row every grid step
    # out_ref   : (B_TILE, F)  — batch tile at block index pl.program_id(0)
    out_ref[...] = jnp.broadcast_to(feats_ref[...], out_ref.shape)


def encoder_dummy_forward(x, feats):
    """Pallas implementation of EncoderDummy.forward.

    Args:
      x:     array whose leading dim is the batch size n (contents unused,
             exactly as in the PyTorch module).
      feats: (num_views, feat_dim, H, W) parameter, num_views must be 1
             (PyTorch `expand` requires size-1 dims to broadcast).

    Returns:
      [out] where out has shape (n, feat_dim, H, W), same dtype as feats.
    """
    n = x.shape[0]
    num_views, feat_dim, H, W = feats.shape
    assert num_views == 1, "expand over batch requires num_views == 1"

    # Flatten C*H*W into a single lane-dense trailing dim.
    F = feat_dim * H * W
    feats_flat = feats.reshape(1, F)

    row_bytes = F * jnp.dtype(feats.dtype).itemsize
    b_tile = _pick_batch_tile(n, row_bytes)
    grid = (pl.cdiv(n, b_tile),)

    out_flat = pl.pallas_call(
        _broadcast_kernel,
        out_shape=jax.ShapeDtypeStruct((n, F), feats.dtype),
        grid=grid,
        in_specs=[
            # feats: always the same (only) block, regardless of batch tile.
            pl.BlockSpec((1, F), lambda i: (0, 0)),
        ],
        out_specs=pl.BlockSpec((b_tile, F), lambda i: (i, 0)),
        compiler_params=pltpu.CompilerParams(
            dimension_semantics=("parallel",),
            vmem_limit_bytes=_VMEM_LIMIT_BYTES,
        ),
    )(feats_flat)

    # Reshape back to NCHW before returning (layout plumbing, no data motion).
    return [out_flat.reshape(n, feat_dim, H, W)]


if __name__ == "__main__":
    # Module config (small, consistent with __init__(size, feat_dim, num_views=1)).
    size = (16, 16)       # (H, W)
    feat_dim = 4
    num_views = 1
    batch = 2

    key = jax.random.PRNGKey(0)
    k_feats, k_x = jax.random.split(key)

    # Deterministic parameter init (stands in for torch.randn in __init__).
    feats = jax.random.normal(
        k_feats, (num_views, feat_dim, *size), dtype=jnp.float32
    )
    # Dummy input: only its batch dimension matters.
    x = jax.random.normal(k_x, (batch, 3, *size), dtype=jnp.float32)

    outputs = encoder_dummy_forward(x, feats)
    out = outputs[0]
    jax.block_until_ready(out)

    # Correctness check against the pure-JAX reference (broadcast).
    ref = jnp.broadcast_to(feats, (batch, feat_dim, *size))
    assert out.shape == (batch, feat_dim, *size), out.shape
    assert out.dtype == feats.dtype
    assert bool(jnp.array_equal(out, ref))

    print("KERNEL_OK")
</pallas_src>

<mosaic_0001>
module attributes {stable_mosaic.version = 11 : i64} {
  func.func @_broadcast_kernel(%arg0: i32, %arg1: memref<1x1024xf32, #tpu.memory_space<vmem>>, %arg2: memref<2x1024xf32, #tpu.memory_space<vmem>>) attributes {dimension_semantics = [#tpu.dimension_semantics<parallel>], iteration_bounds = array<i64: 1>, scalar_prefetch = 0 : i64, scratch_operands = 0 : i64, tpu.core_type = #tpu.core_type<tc>, window_params = [{pipeline_mode = #tpu.pipeline_mode<synchronous>, transform_indices = @transform_0, window_bounds = array<i64: 1, 1024>}, {transform_indices = @transform_1, window_bounds = array<i64: 2, 1024>}]} {
    %c0 = arith.constant 0 : index
    %c0_0 = arith.constant 0 : index
    %0 = vector.load %arg1[%c0, %c0_0] : memref<1x1024xf32, #tpu.memory_space<vmem>>, vector<1x1024xf32>
    %1 = vector.shape_cast %0 : vector<1x1024xf32> to vector<1x1024xf32>
    %2 = vector.broadcast %1 : vector<1x1024xf32> to vector<2x1024xf32>
    %c0_1 = arith.constant 0 : index
    %c0_2 = arith.constant 0 : index
    %3 = vector.load %arg2[%c0_1, %c0_2] : memref<2x1024xf32, #tpu.memory_space<vmem>>, vector<2x1024xf32>
    tpu.vector_store %arg2[%c0_1, %c0_2], %2 {strides = array<i32>} : memref<2x1024xf32, #tpu.memory_space<vmem>>, vector<2x1024xf32>,
    return
  }
  func.func @transform_0(%arg0: i32) -> (i32, i32) {
    %c0_i32 = arith.constant 0 : i32
    %c0_i32_0 = arith.constant 0 : i32
    %c0_i32_1 = arith.constant 0 : i32
    return %c0_i32, %c0_i32_0 : i32, i32
  }
  func.func @transform_1(%arg0: i32) -> (i32, i32) {
    %c0_i32 = arith.constant 0 : i32
    %c0_i32_0 = arith.constant 0 : i32
    return %arg0, %c0_i32 : i32, i32
  }
}

</mosaic_0001>

<llo_original>
// kernel: tpu_custom_call.1
$region0: #{tpu_custom_call.1}
  #allocation0 [shape = 'u32[]', space=smem, size = 0x4, offset = 0x4, fixed_abs, tag = 'smem constant byte address 0x4 - core index']
  #allocation1 [shape = 'u32[144,128]{1,0:T(1,128)}', space=vmem, size = 0x12000, scoped, tag = 'internal scratch']
  %s0 = inlined_call_operand.hbm [shape: f32[1,1024], index: 0, kind: input, shape index: {}]
  %s1 = inlined_call_operand.hbm [shape: f32[2,1024], index: 1, kind: output, shape index: {}]
  %s2 = sld [smem:[#allocation0]]
  $region18: #{tpu_custom_call.1} parent=0
    _
  %s4 = ssub.s32 1, %s2
  %s5 = scalar_select 0, %s4, %s2
  $region1: #{tpu_custom_call.1} parent=0
    #allocation2 [shape = 'u8[4096]{0}', space=vmem, size = 0x1000, scoped, tag = 'input window, operand 0, single buffered']
    #allocation3 [shape = 's32[1]{0}', space=sflag, size = 0x4, scoped, tag = 'scoped memory for tpu_custom_call.1']
    #allocation4 [shape = 's32[1]{0}', space=sflag, size = 0x4, scoped, tag = 'scoped memory for tpu_custom_call.1']
    #allocation5 [shape = 'u8[8192]{0}', space=vmem, size = 0x2000, scoped, tag = 'output window, operand 0, single buffered']
    %6 = vsyncpa [#allocation3], 0
    %7 = vsyncpa [#allocation4], 0
    // Predicated region
    $region2: #{tpu_custom_call.1} parent=1 // pred_check
      _
    $region3: #{tpu_custom_call.1} parent=1 // pred_check_branch
      %9 = sbr.rel (0) target = $region5
    $region4: #{tpu_custom_call.1} parent=1 // pred_region
      %s11 = ssub.s32 128, 128
      %12 = vsyncadd [#allocation3], %s11
      %s14 = sshll.u32 [#allocation2], 4
      %s15 = int_to_ptr.vmem [resolvable:$true] %s14
      %17 = dma.hbm_to_vmem [thread:$0]  %s0, 128, %s15, [#allocation3]
    $region5: #{tpu_custom_call.1} parent=1 // pred_fallthru
      _
    // Predicated region
    $region6: #{tpu_custom_call.1} parent=1 // pred_check
      _
    $region7: #{tpu_custom_call.1} parent=1 // pred_check_branch
      %19 = sbr.rel (0) target = $region9
    $region8: #{tpu_custom_call.1} parent=1 // pred_region
      %20 = dma.done [#allocation3], 128
    $region9: #{tpu_custom_call.1} parent=1 // pred_fallthru
      _
    %v21 = vld [vmem:[#allocation2] sm:$0xff]
    %v23 = vlaneseq
    %v24 = vshrl.u32 %v23, 7
    %v25 = vsub.s32 0, %v24
    %v26 = vrot.slane %v21, %v25
    %v27 = vlaneseq
    %v28 = vshrl.u32 %v27, 7
    %v29 = vsub.s32 1, %v28
    %v30 = vrot.slane %v21, %v29
    %v31 = vlaneseq
    %v32 = vshrl.u32 %v31, 7
    %v33 = vsub.s32 2, %v32
    %v34 = vrot.slane %v21, %v33
    %v35 = vlaneseq
    %v36 = vshrl.u32 %v35, 7
    %v37 = vsub.s32 3, %v36
    %v38 = vrot.slane %v21, %v37
    %v39 = vlaneseq
    %v40 = vshrl.u32 %v39, 7
    %v41 = vsub.s32 4, %v40
    %v42 = vrot.slane %v21, %v41
    %v43 = vlaneseq
    %v44 = vshrl.u32 %v43, 7
    %v45 = vsub.s32 5, %v44
    %v46 = vrot.slane %v21, %v45
    %v47 = vlaneseq
    %v48 = vshrl.u32 %v47, 7
    %v49 = vsub.s32 6, %v48
    %v50 = vrot.slane %v21, %v49
    %v51 = vlaneseq
    %v52 = vshrl.u32 %v51, 7
    %v53 = vsub.s32 7, %v52
    %v54 = vrot.slane %v21, %v53
    %v55 = vcombine.low %v26, %v30
    %v56 = vcombine.low %v34, %v38
    %v58 = vunpack.c.l.s4 1983009808
    %v59 = vunpack.c.0.s8 %v58
    %v60 = vlaneseq
    %v61 = vshrl.u32 %v60, 7
    %v62 = vsub.s32 %v59, %v61
    %v63 = vrot.slane %v55, %v62
    %v65 = vunpack.c.l.s4 1983009808
    %v66 = vunpack.c.0.s8 %v65
    %v67 = vlaneseq
    %v68 = vshrl.u32 %v67, 7
    %v69 = vsub.s32 %v66, %v68
    %v70 = vrot.slane %v56, %v69
    %v71 = vcombine.low %v63, %v70
    %v72 = vcombine.low %v42, %v46
    %v73 = vcombine.low %v50, %v54
    %v75 = vunpack.c.l.s4 1983009808
    %v76 = vunpack.c.0.s8 %v75
    %v77 = vlaneseq
    %v78 = vshrl.u32 %v77, 7
    %v79 = vsub.s32 %v76, %v78
    %v80 = vrot.slane %v72, %v79
    %v82 = vunpack.c.l.s4 1983009808
    %v83 = vunpack.c.0.s8 %v82
    %v84 = vlaneseq
    %v85 = vshrl.u32 %v84, 7
    %v86 = vsub.s32 %v83, %v85
    %v87 = vrot.slane %v73, %v86
    %v88 = vcombine.low %v80, %v87
    %91 = vst [vmem:[#allocation5] sm:$0xff] %v71
    %92 = vst [vmem:[#allocation5 + $0x8] sm:$0xff] %v88
    // Predicated region
    $region10: #{tpu_custom_call.1} parent=1 // pred_check
      _
    $region11: #{tpu_custom_call.1} parent=1 // pred_check_branch
      %94 = sbr.rel (0) target = $region13
    $region12: #{tpu_custom_call.1} parent=1 // pred_region
      %s96 = ssub.s32 256, 256
      %97 = vsyncadd [#allocation4], %s96
      %s99 = sshll.u32 [#allocation5], 4
      %s100 = int_to_ptr.vmem [resolvable:$true] %s99
      %102 = dma.vmem_to_hbm [thread:$0]  %s100, 256, %s1, [#allocation4]
    $region13: #{tpu_custom_call.1} parent=1 // pred_fallthru
      _
    // Predicated region
    $region14: #{tpu_custom_call.1} parent=1 // pred_check
      _
    $region15: #{tpu_custom_call.1} parent=1 // pred_check_branch
      %104 = sbr.rel (0) target = $region17
    $region16: #{tpu_custom_call.1} parent=1 // pred_region
      %105 = dma.done [#allocation4], 256
    $region17: #{tpu_custom_call.1} parent=1 // pred_fallthru
      _
    %106 = vsyncpa [#allocation3], 1
    %107 = vsyncpa [#allocation4], 1

</llo_original>
